<compile_context>
chip_gen: v5e
topology: v5e:2x2
jax: 0.10.0
libtpu: 0.0.40
codegen_flags: <defaults>
</compile_context>

<pallas_src>
from abc import ABCMeta, abstractmethod

import jax
import jax.numpy as jnp
from jax.experimental import pallas as pl
from jax.experimental.pallas import tpu as pltpu


# ----------------------------------------------------------------------------
# Pallas kernel: accumulate spatial/modality partial sums, then matmul + bias.
# ----------------------------------------------------------------------------
def _gap_linear_kernel(x_ref, w_ref, b_ref, o_ref, acc_ref):
    # Grid = (batch_tile i, modality m, hw_tile k); m and k are reduction axes.
    # x_ref:   (tn, C, thw)   input tile (modality dim squeezed)
    # w_ref:   (C, K_pad)     weights, already scaled by 1/(H*W*M)
    # b_ref:   (1, K_pad)     bias
    # o_ref:   (tn, K_pad)    logits output tile (written on last step only)
    # acc_ref: (tn, C) f32    running pooled-sum accumulator (VMEM scratch)
    m = pl.program_id(1)
    k = pl.program_id(2)
    is_first = (m == 0) & (k == 0)
    is_last = ((m == pl.num_programs(1) - 1) &
               (k == pl.num_programs(2) - 1))

    @pl.when(is_first)
    def _():
        acc_ref[...] = jnp.zeros_like(acc_ref)

    # Accumulate in f32 regardless of input dtype (bf16-safe).
    x = x_ref[...].astype(jnp.float32)                      # (tn, C, thw)
    acc_ref[...] += jnp.sum(x, axis=-1)                     # spatial partial sum

    @pl.when(is_last)
    def _():
        logits = jnp.dot(acc_ref[...], w_ref[...],
                         preferred_element_type=jnp.float32)  # MXU
        o_ref[...] = (logits + b_ref[...]).astype(o_ref.dtype)


def _pick_hw_tile(hw, tn, c, itemsize, budget_bytes):
    """Largest power-of-two multiple of 128 dividing hw under the byte budget."""
    if hw % 128 != 0:
        return hw  # block dim equal to full array dim is always legal
    thw = 128
    while (thw * 2 <= hw and hw % (thw * 2) == 0
           and tn * c * (thw * 2) * itemsize <= budget_bytes):
        thw *= 2
    return thw


def localizer_head_fused(x_stacked, w, b, *, hw_tile=None,
                         max_hw_tile_bytes=8 << 20):
    """x_stacked: (M, N, C, H, W) -> logits (N, K) float32.

    Computes mean over modalities of (GAP(x_m) @ w + b) in one pallas_call.
    """
    M, N, C, H, W = x_stacked.shape
    K = w.shape[1]
    HW = H * W

    # Fold spatial mean and modality averaging into the (tiny) weight matrix.
    w_scaled = (w / float(HW * M)).astype(jnp.float32)
    b2 = jnp.asarray(b, jnp.float32).reshape(1, K)

    # --- padding for dense vreg tiles -------------------------------------
    K_pad = pl.cdiv(K, 128) * 128                 # lane-dense logits
    N_pad = pl.cdiv(N, 8) * 8                     # sublane-aligned batch
    tn = min(N_pad, 64)
    N_pad = pl.cdiv(N_pad, tn) * tn

    x_flat = x_stacked.reshape(M, N, C, HW)
    itemsize = x_flat.dtype.itemsize
    if hw_tile is None:
        thw = _pick_hw_tile(HW, tn, C, itemsize, max_hw_tile_bytes)
    else:
        assert HW % hw_tile == 0 and (hw_tile % 128 == 0 or hw_tile == HW), (
            "hw_tile must divide H*W and be a multiple of 128 (or equal H*W)")
        thw = hw_tile

    x_pad = jnp.pad(x_flat, ((0, 0), (0, N_pad - N), (0, 0), (0, 0)))
    w_pad = jnp.pad(w_scaled, ((0, 0), (0, K_pad - K)))
    b_pad = jnp.pad(b2, ((0, 0), (0, K_pad - K)))

    grid = (N_pad // tn, M, HW // thw)

    # --- VMEM budget (double-buffered inputs + output + accumulator) ------
    in_tile_bytes = tn * C * thw * itemsize
    vmem_need = (2 * in_tile_bytes
                 + 2 * (C * K_pad + K_pad) * 4
                 + 2 * tn * K_pad * 4
                 + tn * max(C, 128) * 4)
    vmem_limit = int(min(max(2 * vmem_need, 4 << 20), 32 << 20))

    cost = pl.CostEstimate(
        flops=int(M * N_pad * C * HW + 2 * N_pad * C * K_pad),
        transcendentals=0,
        bytes_accessed=int(x_pad.size * itemsize
                           + (w_pad.size + b_pad.size + N_pad * K_pad) * 4),
    )

    logits_pad = pl.pallas_call(
        _gap_linear_kernel,
        out_shape=jax.ShapeDtypeStruct((N_pad, K_pad), jnp.float32),
        grid_spec=pltpu.PrefetchScalarGridSpec(
            num_scalar_prefetch=0,
            grid=grid,
            in_specs=[
                # Modality dim squeezed; last two block dims (C, thw) satisfy
                # the (8,128) rule (C equals the full dim, thw % 128 == 0).
                pl.BlockSpec((None, tn, C, thw), lambda i, m, k: (m, i, 0, k)),
                pl.BlockSpec((C, K_pad), lambda i, m, k: (0, 0)),
                pl.BlockSpec((1, K_pad), lambda i, m, k: (0, 0)),
            ],
            out_specs=pl.BlockSpec((tn, K_pad), lambda i, m, k: (i, 0)),
            scratch_shapes=[pltpu.VMEM((tn, C), jnp.float32)],
        ),
        compiler_params=pltpu.CompilerParams(
            dimension_semantics=("parallel", "arbitrary", "arbitrary"),
            vmem_limit_bytes=vmem_limit),
        cost_estimate=cost,
    )(x_pad, w_pad, b_pad)

    return logits_pad[:N, :K]


# ----------------------------------------------------------------------------
# BaseLocalizer: dispatch semantics mirrored from the PyTorch module.
# ----------------------------------------------------------------------------
class BaseLocalizer(metaclass=ABCMeta):
    """Base class for localizers (JAX/Pallas port)."""

    @abstractmethod
    def forward_train(self, num_modalities, img_meta, **kwargs):
        pass

    @abstractmethod
    def forward_test(self, num_modalities, img_meta, **kwargs):
        pass

    def init_weights(self, pretrained=None):
        # TODO(synk): checkpoint loading has no Pallas equivalent; params are
        # initialized deterministically in-script instead.
        pass

    def forward(self, num_modalities, img_meta, return_loss=True, **kwargs):
        num_modalities = int(num_modalities[0])
        if return_loss:
            return self.forward_train(num_modalities, img_meta, **kwargs)
        else:
            return self.forward_test(num_modalities, img_meta, **kwargs)


class SimpleLocalizer(BaseLocalizer):
    """Minimal concrete localizer: GAP + linear head, fused in one Pallas call.

    The original forward_train / forward_test bodies are abstract in the
    reference module; this concrete head stands in for them so the kernel has
    real compute to exercise.
    """

    def __init__(self, in_channels, num_classes, hw_tile=None):
        key = jax.random.PRNGKey(0)
        kw, kb = jax.random.split(key)
        self.weight = jax.random.normal(
            kw, (in_channels, num_classes), dtype=jnp.float32) * 0.02
        self.bias = jax.random.normal(
            kb, (1, num_classes), dtype=jnp.float32) * 0.02
        # hw_tile=None -> auto-size the spatial tile; a fixed small tile is
        # used in the demo to exercise the multi-step reduction pipeline.
        self.hw_tile = hw_tile

    def _extract(self, num_modalities, imgs):
        # All modalities fused into one kernel call (single launch, single
        # matmul + bias, no per-modality logits round-trip through HBM).
        x_stacked = jnp.stack(imgs[:num_modalities], axis=0)  # (M, N, C, H, W)
        return localizer_head_fused(x_stacked, self.weight, self.bias,
                                    hw_tile=self.hw_tile)

    def forward_train(self, num_modalities, img_meta, imgs=None, **kwargs):
        logits = self._extract(num_modalities, imgs)
        # Synthetic training objective (the real loss lives in concrete
        # mmaction subclasses, which are abstract here).
        loss = jnp.mean(logits * logits)
        return dict(loss=loss, logits=logits)

    def forward_test(self, num_modalities, img_meta, imgs=None, **kwargs):
        return self._extract(num_modalities, imgs)


# ----------------------------------------------------------------------------
if __name__ == "__main__":
    N, C, H, W = 2, 4, 16, 16
    K = 8
    num_mod = 2

    key = jax.random.PRNGKey(0)
    k1, k2 = jax.random.split(key)
    x0 = jax.random.normal(k1, (N, C, H, W), dtype=jnp.float32)
    x1 = jax.random.normal(k2, (N, C, H, W), dtype=jnp.float32)

    # hw_tile=128 -> two spatial reduction steps at these demo shapes so the
    # in-kernel accumulator path (pl.when init/finalize) is exercised.
    model = SimpleLocalizer(in_channels=C, num_classes=K, hw_tile=128)
    model.init_weights(pretrained=None)

    num_modalities = [num_mod]
    img_meta = [dict()] * N

    # Train-mode dispatch (return_loss=True)
    train_out = model.forward(num_modalities, img_meta,
                              return_loss=True, imgs=[x0, x1])
    jax.block_until_ready(train_out["loss"])

    # Test-mode dispatch (return_loss=False)
    test_out = model.forward(num_modalities, img_meta,
                             return_loss=False, imgs=[x0, x1])
    test_out = jax.block_until_ready(test_out)

    # Plain-JAX reference: mean over modalities of (GAP @ W + b).
    ref = None
    for xm in (x0, x1):
        pooled = jnp.mean(xm.reshape(N, C, H * W), axis=-1)
        lg = pooled @ model.weight + model.bias
        ref = lg if ref is None else ref + lg
    ref = ref / float(num_mod)

    assert test_out.shape == (N, K)
    assert jnp.allclose(test_out, ref, atol=1e-4, rtol=1e-4), (
        jnp.abs(test_out - ref).max())
    assert jnp.allclose(train_out["logits"], ref, atol=1e-4, rtol=1e-4)

    print("KERNEL_OK")
</pallas_src>

<mosaic_0001>
module attributes {stable_mosaic.version = 11 : i64} {
  func.func @_gap_linear_kernel(%arg0: i32, %arg1: i32, %arg2: i32, %arg3: memref<1x8x4x128xf32, #tpu.memory_space<vmem>>, %arg4: memref<4x128xf32, #tpu.memory_space<vmem>>, %arg5: memref<1x128xf32, #tpu.memory_space<vmem>>, %arg6: memref<8x128xf32, #tpu.memory_space<vmem>>, %arg7: memref<8x4xf32, #tpu.memory_space<vmem>>) attributes {dimension_semantics = [#tpu.dimension_semantics<parallel>, #tpu.dimension_semantics<arbitrary>, #tpu.dimension_semantics<arbitrary>], iteration_bounds = array<i64: 1, 2, 2>, scalar_prefetch = 0 : i64, scratch_operands = 1 : i64, tpu.core_type = #tpu.core_type<tc>, window_params = [{transform_indices = @transform_0, window_bounds = array<i64: 1, 8, 4, 128>}, {pipeline_mode = #tpu.pipeline_mode<synchronous>, transform_indices = @transform_1, window_bounds = array<i64: 4, 128>}, {pipeline_mode = #tpu.pipeline_mode<synchronous>, transform_indices = @transform_2, window_bounds = array<i64: 1, 128>}, {transform_indices = @transform_3, window_bounds = array<i64: 8, 128>}]} {
    %c0_i32 = arith.constant 0 : i32
    %0 = arith.cmpi eq, %arg1, %c0_i32 : i32
    %c0_i32_0 = arith.constant 0 : i32
    %1 = arith.cmpi eq, %arg2, %c0_i32_0 : i32
    %2 = arith.andi %0, %1 : i1
    %c1_i32 = arith.constant 1 : i32
    %3 = arith.cmpi eq, %arg1, %c1_i32 : i32
    %c1_i32_1 = arith.constant 1 : i32
    %4 = arith.cmpi eq, %arg2, %c1_i32_1 : i32
    %5 = arith.andi %3, %4 : i1
    %6 = arith.extui %2 : i1 to i32
    %c0_i32_2 = arith.constant 0 : i32
    %7 = arith.cmpi ne, %6, %c0_i32_2 : i32
    scf.if %7 {
      %cst_11 = arith.constant 0.000000e+00 : f32
      %16 = vector.broadcast %cst_11 : f32 to vector<8x4xf32>
      %c0_12 = arith.constant 0 : index
      %c0_13 = arith.constant 0 : index
      %17 = vector.load %arg7[%c0_12, %c0_13] : memref<8x4xf32, #tpu.memory_space<vmem>>, vector<8x4xf32>
      tpu.vector_store %arg7[%c0_12, %c0_13], %16 {strides = array<i32>} : memref<8x4xf32, #tpu.memory_space<vmem>>, vector<8x4xf32>,
    } else {
    }
    %c0 = arith.constant 0 : index
    %c0_3 = arith.constant 0 : index
    %c0_4 = arith.constant 0 : index
    %c0_5 = arith.constant 0 : index
    %8 = vector.load %arg3[%c0, %c0_3, %c0_4, %c0_5] : memref<1x8x4x128xf32, #tpu.memory_space<vmem>>, vector<1x8x4x128xf32>
    %9 = vector.shape_cast %8 : vector<1x8x4x128xf32> to vector<8x4x128xf32>
    %c0_6 = arith.constant 0 : index
    %c0_7 = arith.constant 0 : index
    %10 = vector.load %arg7[%c0_6, %c0_7] : memref<8x4xf32, #tpu.memory_space<vmem>>, vector<8x4xf32>
    %cst = arith.constant dense<0.000000e+00> : vector<8x4xf32>
    %11 = vector.multi_reduction <add>, %9, %cst [2] : vector<8x4x128xf32> to vector<8x4xf32>
    %12 = arith.addf %10, %11 : vector<8x4xf32>
    %c0_8 = arith.constant 0 : index
    %c0_9 = arith.constant 0 : index
    %13 = vector.load %arg7[%c0_8, %c0_9] : memref<8x4xf32, #tpu.memory_space<vmem>>, vector<8x4xf32>
    tpu.vector_store %arg7[%c0_8, %c0_9], %12 {strides = array<i32>} : memref<8x4xf32, #tpu.memory_space<vmem>>, vector<8x4xf32>,
    %14 = arith.extui %5 : i1 to i32
    %c0_i32_10 = arith.constant 0 : i32
    %15 = arith.cmpi ne, %14, %c0_i32_10 : i32
    scf.if %15 {
      %c0_11 = arith.constant 0 : index
      %c0_12 = arith.constant 0 : index
      %16 = vector.load %arg7[%c0_11, %c0_12] : memref<8x4xf32, #tpu.memory_space<vmem>>, vector<8x4xf32>
      %c0_13 = arith.constant 0 : index
      %c0_14 = arith.constant 0 : index
      %17 = vector.load %arg4[%c0_13, %c0_14] : memref<4x128xf32, #tpu.memory_space<vmem>>, vector<4x128xf32>
      %cst_15 = arith.constant dense<0.000000e+00> : vector<8x128xf32>
      %18 = tpu.matmul %16, %17, %cst_15 {dimension_numbers = #tpu.dot_dimension_numbers<[1], [0], [0], [1], [0, 0, 1, 1], [], []>} : vector<8x4xf32>, vector<4x128xf32>, vector<8x128xf32> -> vector<8x128xf32>
      %c0_16 = arith.constant 0 : index
      %c0_17 = arith.constant 0 : index
      %19 = vector.load %arg5[%c0_16, %c0_17] : memref<1x128xf32, #tpu.memory_space<vmem>>, vector<1x128xf32>
      %20 = vector.broadcast %19 : vector<1x128xf32> to vector<8x128xf32>
      %21 = arith.addf %18, %20 : vector<8x128xf32>
      %c0_18 = arith.constant 0 : index
      %c0_19 = arith.constant 0 : index
      %22 = vector.load %arg6[%c0_18, %c0_19] : memref<8x128xf32, #tpu.memory_space<vmem>>, vector<8x128xf32>
      tpu.vector_store %arg6[%c0_18, %c0_19], %21 {strides = array<i32>} : memref<8x128xf32, #tpu.memory_space<vmem>>, vector<8x128xf32>,
    } else {
    }
    return
  }
  func.func @transform_0(%arg0: i32, %arg1: i32, %arg2: i32) -> (i32, i32, i32, i32) {
    %c0_i32 = arith.constant 0 : i32
    %c0_i32_0 = arith.constant 0 : i32
    return %arg1, %arg0, %c0_i32, %arg2 : i32, i32, i32, i32
  }
  func.func @transform_1(%arg0: i32, %arg1: i32, %arg2: i32) -> (i32, i32) {
    %c0_i32 = arith.constant 0 : i32
    %c0_i32_0 = arith.constant 0 : i32
    %c0_i32_1 = arith.constant 0 : i32
    return %c0_i32, %c0_i32_0 : i32, i32
  }
  func.func @transform_2(%arg0: i32, %arg1: i32, %arg2: i32) -> (i32, i32) {
    %c0_i32 = arith.constant 0 : i32
    %c0_i32_0 = arith.constant 0 : i32
    %c0_i32_1 = arith.constant 0 : i32
    return %c0_i32, %c0_i32_0 : i32, i32
  }
  func.func @transform_3(%arg0: i32, %arg1: i32, %arg2: i32) -> (i32, i32) {
    %c0_i32 = arith.constant 0 : i32
    %c0_i32_0 = arith.constant 0 : i32
    return %arg0, %c0_i32 : i32, i32
  }
}

</mosaic_0001>

<llo_original>
// kernel: tpu_custom_call.1
$region0: #{tpu_custom_call.1}
  #allocation0 [shape = 'u32[]', space=smem, size = 0x4, offset = 0x4, fixed_abs, tag = 'smem constant byte address 0x4 - core index']
  #allocation1 [shape = 'u32[72,128]{1,0:T(1,128)}', space=vmem, size = 0x9000, scoped, tag = 'internal scratch']
  #allocation2 [shape = 'f32[8,4]{1,0:T(8,128)}', space=vmem, size = 0x1000, scoped, tag = 'scratch operand']
  %s0 = inlined_call_operand.hbm [shape: f32[2,8,4,256], index: 0, kind: input, shape index: {}]
  %s1 = inlined_call_operand.hbm [shape: f32[4,128], index: 1, kind: input, shape index: {}]
  %s2 = inlined_call_operand.vmem [shape: f32[1,128], index: 2, kind: input, shape index: {}]
  %s3 = inlined_call_operand.hbm [shape: f32[8,128], index: 3, kind: output, shape index: {}]
  %s4 = sld [smem:[#allocation0]]
  $region61: #{tpu_custom_call.1} parent=0
    _
  %s6 = ssub.s32 1, %s4
  %s7 = scalar_select 0, %s6, %s4
  $region1: #{tpu_custom_call.1} parent=0
    #allocation3 [shape = 'u8[32768]{0}', space=vmem, size = 0x8000, scoped, tag = 'input window, operand 0']
    #allocation4 [shape = 's32[2]{0}', space=sflag, size = 0x8, scoped, tag = 'scoped memory for tpu_custom_call.1']
    #allocation5 [shape = 's32[2]{0}', space=sflag, size = 0x8, scoped, tag = 'scoped memory for tpu_custom_call.1']
    #allocation6 [shape = 'u8[2048]{0}', space=vmem, size = 0x800, scoped, tag = 'input window, operand 1, single buffered']
    #allocation7 [shape = 's32[1]{0}', space=sflag, size = 0x4, scoped, tag = 'scoped memory for tpu_custom_call.1']
    #allocation8 [shape = 'u8[4096]{0}', space=vmem, size = 0x1000, scoped, tag = 'output window, operand 0, single buffered']
    %8 = vsyncpa [#allocation4], 0
    %s9 = scalar_lea.sflag [#allocation4], 1
    %10 = vsyncpa %s9, 0
    %11 = vsyncpa [#allocation7], 0
    %12 = vsyncpa [#allocation5], 0
    loop: start=0, step=1, limit=6
    $region2: #{tpu_custom_call.1} parent=1 // loop_pre_header
      _
    $region3: #{tpu_custom_call.1} parent=1 // loop_header
      %s14 = sphi 0, %s18
      %p15 = scmp.ge.s32.totalorder %s14, 6
      %s21 = sphi 0, %s40
      %s22 = sphi 0, %s36
      %s23 = sphi 0, %s32
      %s24 = sphi 0, %s21
      %s25 = sphi 0, %s22
      %s26 = sphi 0, %s23
      %s27 = sphi 0, %s24
      %s28 = sphi 0, %s25
      %s29 = sphi 0, %s26
      %s47 = sphi 0, %s49
      %s50 = sphi 0, %s47
      %s51 = sphi 0, %s50
      %s67 = sphi 0, %s51
      %s71 = sphi 0, %s71
      %s73 = sphi 0, %s71
      %s74 = sphi 0, %s73
      %s88 = sphi 0, %s74
      %s92 = sphi 0, %s92
      %s94 = sphi 0, %s92
      %s95 = sphi 0, %s94
      %s109 = sphi 0, %s95
      %s115 = sphi 0, %s117
      %s118 = sphi 0, %s115
      %s119 = sphi 0, %s118
      %s135 = sphi 0, %s119
    $region4: #{tpu_custom_call.1} parent=1 // loop_header_branch
      %17 = sbr.rel (%p15) target = $region8
    $region5: #{tpu_custom_call.1} parent=1 // loop_body
      %s19 = ssub.s32 %s14, 1
      %s20 = ssub.s32 %s14, 2
      %s30 = sadd.s32 1, %s23
      %p31 = scmp.ge.s32.totalorder %s30, 2
      %s32 = scalar_select %p31, 0, %s30
      %s33 = sadd.s32 1, %s22
      %s34 = scalar_select %p31, %s33, %s22
      %p35 = scmp.ge.s32.totalorder %s34, 2
      %s36 = scalar_select %p35, 0, %s34
      %s37 = sadd.s32 1, %s21
      %s38 = scalar_select %p35, %s37, %s21
      %p39 = scmp.ge.s32.totalorder %s38, 1
      %s40 = scalar_select %p39, 0, %s38
      %s41 = ssub.s32 %s22, %s36
      %s42 = ssub.s32 %s21, %s40
      %s43 = sor.u32 %s41, %s42
      %s44 = ssub.s32 %s23, %s32
      %s45 = sor.u32 %s43, %s44
      %p46 = scmp.eq.s32.totalorder %s45, 0
      %s48 = sadd.s32 %s47, 1
      %s49 = scalar_select %p46, %s47, %s48
      %p52 = pneg %p46
      %p53 = scmp.eq.s32.totalorder %s14, 3
      %p54 = por %p52, %p53
      %p55 = scmp.ne.s32.totalorder %s47, %s50
      %p56 = scmp.eq.s32.totalorder %s14, 0
      %p57 = por %p55, %p56
      %p58 = scmp.ne.s32.totalorder %s47, %s50
      %p59 = scmp.eq.s32.totalorder %s19, 3
      %p60 = por %p58, %p59
      %p61 = scmp.ne.s32.totalorder %s50, %s51
      %p62 = scmp.eq.s32.totalorder %s19, 0
      %p63 = por %p61, %p62
      %p64 = scmp.ne.s32.totalorder %s50, %s51
      %p65 = scmp.eq.s32.totalorder %s20, 3
      %p66 = por %p64, %p65
      %p68 = scmp.ne.s32.totalorder %s51, %s67
      %p69 = scmp.eq.s32.totalorder %s20, 0
      %p70 = por %p68, %p69
      %s72 = sadd.s32 %s71, 1
      %p75 = scmp.eq.s32.totalorder %s14, 3
      %p76 = scmp.ne.s32.totalorder %s71, %s73
      %p77 = scmp.eq.s32.totalorder %s14, 0
      %p78 = por %p76, %p77
      %p79 = scmp.ne.s32.totalorder %s71, %s73
      %p80 = scmp.eq.s32.totalorder %s19, 3
      %p81 = por %p79, %p80
      %p82 = scmp.ne.s32.totalorder %s73, %s74
      %p83 = scmp.eq.s32.totalorder %s19, 0
      %p84 = por %p82, %p83
      %p85 = scmp.ne.s32.totalorder %s73, %s74
      %p86 = scmp.eq.s32.totalorder %s20, 3
      %p87 = por %p85, %p86
      %p89 = scmp.ne.s32.totalorder %s74, %s88
      %p90 = scmp.eq.s32.totalorder %s20, 0
      %p91 = por %p89, %p90
      %s93 = sadd.s32 %s92, 1
      %p96 = scmp.eq.s32.totalorder %s14, 3
      %p97 = scmp.ne.s32.totalorder %s92, %s94
      %p98 = scmp.eq.s32.totalorder %s14, 0
      %p99 = por %p97, %p98
      %p100 = scmp.ne.s32.totalorder %s92, %s94
      %p101 = scmp.eq.s32.totalorder %s19, 3
      %p102 = por %p100, %p101
      %p103 = scmp.ne.s32.totalorder %s94, %s95
      %p104 = scmp.eq.s32.totalorder %s19, 0
      %p105 = por %p103, %p104
      %p106 = scmp.ne.s32.totalorder %s94, %s95
      %p107 = scmp.eq.s32.totalorder %s20, 3
      %p108 = por %p106, %p107
      %p110 = scmp.ne.s32.totalorder %s95, %s109
      %p111 = scmp.eq.s32.totalorder %s20, 0
      %p112 = por %p110, %p111
      %s113 = ssub.s32 %s21, %s40
      %p114 = scmp.eq.s32.totalorder %s113, 0
      %s116 = sadd.s32 %s115, 1
      %s117 = scalar_select %p114, %s115, %s116
      %p120 = pneg %p114
      %p121 = scmp.eq.s32.totalorder %s14, 3
      %p122 = por %p120, %p121
      %p123 = scmp.ne.s32.totalorder %s115, %s118
      %p124 = scmp.eq.s32.totalorder %s14, 0
      %p125 = por %p123, %p124
      %p126 = scmp.ne.s32.totalorder %s115, %s118
      %p127 = scmp.eq.s32.totalorder %s19, 3
      %p128 = por %p126, %p127
      %p129 = scmp.ne.s32.totalorder %s118, %s119
      %p130 = scmp.eq.s32.totalorder %s19, 0
      %p131 = por %p129, %p130
      %p132 = scmp.ne.s32.totalorder %s118, %s119
      %p133 = scmp.eq.s32.totalorder %s20, 3
      %p134 = por %p132, %p133
      %p136 = scmp.ne.s32.totalorder %s119, %s135
      %p137 = scmp.eq.s32.totalorder %s20, 0
      %p138 = por %p136, %p137
      %p139 = scmp.le.s32.totalorder 1, %s14
      %p140 = scmp.lt.s32.totalorder %s14, 5
      %p141 = pnand %p139, %p140
      %p142 = pneg %p141
      // Predicated region
      $region9: #{tpu_custom_call.1} parent=5 // pred_check
        _
      $region10: #{tpu_custom_call.1} parent=5 // pred_check_branch
        %144 = sbr.rel (%p141) target = $region12
      $region11: #{tpu_custom_call.1} parent=5 // pred_region
        %s145 = ssub.s32 %s14, 1
        // Predicated region
        $region13: #{tpu_custom_call.1} parent=11 // pred_check
          %p146 = pneg %p84
        $region14: #{tpu_custom_call.1} parent=11 // pred_check_branch
          %148 = sbr.rel (%p146) target = $region16
        $region15: #{tpu_custom_call.1} parent=11 // pred_region
          %150 = vsyncadd [#allocation7], 0
          %s152 = sshll.u32 %s1, 4
          %s153 = int_to_ptr.hbm [resolvable:$true] %s152
          %s154 = sshll.u32 [#allocation6], 4
          %s155 = int_to_ptr.vmem [resolvable:$true] %s154
          %157 = dma.hbm_to_vmem [thread:$0]  %s153, 64, %s155, [#allocation7]
        $region16: #{tpu_custom_call.1} parent=11 // pred_fallthru
          _
        // Predicated region
        $region17: #{tpu_custom_call.1} parent=11 // pred_check
          %p158 = pneg %p105
        $region18: #{tpu_custom_call.1} parent=11 // pred_check_branch
          %160 = sbr.rel (%p158) target = $region20
        $region19: #{tpu_custom_call.1} parent=11 // pred_region
          _
        $region20: #{tpu_custom_call.1} parent=11 // pred_fallthru
          _
      $region12: #{tpu_custom_call.1} parent=5 // pred_fallthru
        _
      %p161 = scmp.lt.s32.totalorder %s14, 4
      // Predicated region
      $region21: #{tpu_custom_call.1} parent=5 // pred_check
        %p162 = pneg %p161
      $region22: #{tpu_custom_call.1} parent=5 // pred_check_branch
        %164 = sbr.rel (%p162) target = $region24
      $region23: #{tpu_custom_call.1} parent=5 // pred_region
        // Predicated region
        $region25: #{tpu_custom_call.1} parent=23 // pred_check
          %p165 = pneg %p57
        $region26: #{tpu_custom_call.1} parent=23 // pred_check_branch
          %167 = sbr.rel (%p165) target = $region28
        $region27: #{tpu_custom_call.1} parent=23 // pred_region
          %s168 = sand.u32 %s47, 1
          %s169 = scalar_lea.sflag [#allocation4], %s168
          %s170 = sand.u32 %s47, 1
          %s171 = smul.addr %s170, 32
          %s172 = scalar_lea.vmem [#allocation3], %s171
          %s173 = smul.u32 8, %s21
          %175 = vsyncadd %s169, 0
          %s176 = smul.addr %s173, 2
          %s177 = sadd.s32 %s23, %s176
          %s178 = smul.addr %s22, 16
          %s179 = sadd.s32 %s177, %s178
          %s180 = smul.addr %s179, 4
          %s181 = scalar_lea.hbm %s0, %s180
          %s182 = sshll.u32 %s181, 4
          %s183 = int_to_ptr.hbm [resolvable:$true] %s182
          %s184 = sshll.u32 %s172, 4
          %s185 = int_to_ptr.vmem [resolvable:$true] %s184
          %190 = dma.hbm_to_vmem [thread:$0]  %s183, 512, %s185, %s169, 128, 64, 4
        $region28: #{tpu_custom_call.1} parent=23 // pred_fallthru
          _
      $region24: #{tpu_custom_call.1} parent=5 // pred_fallthru
        _
      %p191 = scmp.le.s32.totalorder 1, %s14
      %p192 = scmp.lt.s32.totalorder %s14, 5
      %p193 = pnand %p191, %p192
      %p194 = pneg %p193
      // Predicated region
      $region29: #{tpu_custom_call.1} parent=5 // pred_check
        _
      $region30: #{tpu_custom_call.1} parent=5 // pred_check_branch
        %196 = sbr.rel (%p193) target = $region32
      $region31: #{tpu_custom_call.1} parent=5 // pred_region
        %s197 = ssub.s32 %s14, 1
        %s198 = sand.u32 %s50, 1
        %s199 = scalar_lea.sflag [#allocation4], %s198
        %s200 = sand.u32 %s50, 1
        %s201 = smul.addr %s200, 32
        %s202 = scalar_lea.vmem [#allocation3], %s201
        // Predicated region
        $region33: #{tpu_custom_call.1} parent=31 // pred_check
          %p203 = pneg %p63
        $region34: #{tpu_custom_call.1} parent=31 // pred_check_branch
          %205 = sbr.rel (%p203) target = $region36
        $region35: #{tpu_custom_call.1} parent=31 // pred_region
          %207 = dma.done %s199, 512
        $region36: #{tpu_custom_call.1} parent=31 // pred_fallthru
          _
        // Predicated region
        $region37: #{tpu_custom_call.1} parent=31 // pred_check
          %p208 = pneg %p84
        $region38: #{tpu_custom_call.1} parent=31 // pred_check_branch
          %210 = sbr.rel (%p208) target = $region40
        $region39: #{tpu_custom_call.1} parent=31 // pred_region
          %212 = dma.done [#allocation7], 64
        $region40: #{tpu_custom_call.1} parent=31 // pred_fallthru
          _
        %s213 = sand.u32 %s50, 1
        %s214 = scalar_lea.sflag [#allocation4], %s213
        %s215 = sand.u32 %s50, 1
        %s216 = smul.addr %s215, 32
        %s217 = scalar_lea.vmem [#allocation3], %s216
        %p218 = pneg %p63
        %p219 = pneg %p60
        %p220 = pneg %p84
        %p221 = pneg %p81
        %p222 = pneg %p105
        %p223 = pneg %p102
        %p224 = pneg %p131
        %p225 = pneg %p128
        %s226 = smul.u32 8, %s24
        %p227 = scmp.eq.s32.totalorder %s25, 0
        %p228 = scmp.eq.s32.totalorder %s26, 0
        %p229 = pnand %p227, %p228
        %p230 = pneg %p229
        %p231 = scmp.eq.s32.totalorder %s25, 1
        %p232 = scmp.eq.s32.totalorder %s26, 1
        %p233 = pnand %p231, %p232
        %p234 = pneg %p233
        // Predicated region
        $region41: #{tpu_custom_call.1} parent=31 // pred_check
          _
        $region42: #{tpu_custom_call.1} parent=31 // pred_check_branch
          %236 = sbr.rel (%p229) target = $region44
        $region43: #{tpu_custom_call.1} parent=31 // pred_region
          %vm237 = vcmask 31744
          %238 = vst.msk [vmem:[#allocation2] sm:$0xff] %vm237, 0.0
        $region44: #{tpu_custom_call.1} parent=31 // pred_fallthru
          _
        %v239 = vld [vmem:[%s202] sm:$0xf]
        %v240 = vld [vmem:[%s202 + $0x4] sm:$0xf]
        %v241 = vld [vmem:[%s202 + $0x8] sm:$0xf]
        %v242 = vld [vmem:[%s202 + $0xc] sm:$0xf]
        %v243 = vld [vmem:[%s202 + $0x10] sm:$0xf]
        %v244 = vld [vmem:[%s202 + $0x14] sm:$0xf]
        %v245 = vld [vmem:[%s202 + $0x18] sm:$0xf]
        %v246 = vld [vmem:[%s202 + $0x1c] sm:$0xf]
        %v247 = vld [vmem:[#allocation2] sm:$0xff]
        %vm248 = vcmask 1043456
        %v249 = vsel %vm248, %v239, 0.0
        %250 = vadd.xlane.f32.xlu0 %v249
        %v251 = vpop.xlane.xlu0 %250
        %v252 = vsel %vm248, %v240, 0.0
        %253 = vadd.xlane.f32.xlu0 %v252
        %v254 = vpop.xlane.xlu0 %253
        %v255 = vsel %vm248, %v241, 0.0
        %256 = vadd.xlane.f32.xlu0 %v255
        %v257 = vpop.xlane.xlu0 %256
        %v258 = vsel %vm248, %v242, 0.0
        %259 = vadd.xlane.f32.xlu0 %v258
        %v260 = vpop.xlane.xlu0 %259
        %v261 = vsel %vm248, %v243, 0.0
        %262 = vadd.xlane.f32.xlu0 %v261
        %v263 = vpop.xlane.xlu0 %262
        %v264 = vsel %vm248, %v244, 0.0
        %265 = vadd.xlane.f32.xlu0 %v264
        %v266 = vpop.xlane.xlu0 %265
        %v267 = vsel %vm248, %v245, 0.0
        %268 = vadd.xlane.f32.xlu0 %v267
        %v269 = vpop.xlane.xlu0 %268
        %v270 = vsel %vm248, %v246, 0.0
        %271 = vadd.xlane.f32.xlu0 %v270
        %v272 = vpop.xlane.xlu0 %271
        %v281 = vlaneseq
        %v282 = vand.u32 %v281, 127
        %v283 = vperm.slane %v251, %v282
        %v284 = vperm.slane %v254, %v282
        %v285 = vperm.slane %v257, %v282
        %v286 = vperm.slane %v260, %v282
        %v287 = vperm.slane %v263, %v282
        %v288 = vperm.slane %v266, %v282
        %v289 = vperm.slane %v269, %v282
        %v290 = vperm.slane %v272, %v282
        %vm291 = vcmask 1041409
        %v292 = vsel %vm291, %v284, %v283
        %vm293 = vcmask 1042434
        %v294 = vsel %vm293, %v285, %v292
        %vm295 = vcmask 1043459
        %v296 = vsel %vm295, %v286, %v294
        %vm297 = vcmask 1044484
        %v298 = vsel %vm297, %v287, %v296
        %vm299 = vcmask 1045509
        %v300 = vsel %vm299, %v288, %v298
        %vm301 = vcmask 1046534
        %v302 = vsel %vm301, %v289, %v300
        %vm303 = vcmask 1047559
        %v304 = vsel %vm303, %v290, %v302
        %v306 = vadd.f32 %v247, %v304
        %vm307 = vcmask 31744
        %308 = vst.msk [vmem:[#allocation2] sm:$0xff] %vm307, %v306
        // Predicated region
        $region45: #{tpu_custom_call.1} parent=31 // pred_check
          _
        $region46: #{tpu_custom_call.1} parent=31 // pred_check_branch
          %310 = sbr.rel (%p233) target = $region48
        $region47: #{tpu_custom_call.1} parent=31 // pred_region
          %v311 = vld [vmem:[#allocation2] sm:$0xff]
          %v312 = vld [vmem:[#allocation6] sm:$0xf]
          %v313 = vld [vmem:[%s2] sm:$0x1]
          %v315 = vperm.slane %v313, 0
          %v318 = vsel %vm307, %v311, 0
          %v321 = vsel %vm248, %v312, 0
          %323 = vmatpush.msra.mxu0 0.0
          %324 = vmatpush.msra.mxu0 0.0
          %325 = vmatpush.msra.mxu0 0.0
          %326 = vmatpush.msra.mxu0 0.0
          %327 = vmatpush.msra.mxu0 0.0
          %328 = vmatpush.msra.mxu0 0.0
          %329 = vmatpush.msra.mxu0 0.0
          %330 = vmatpush.msra.mxu0 0.0
          %331 = vmatpush.msra.mxu0 0.0
          %332 = vmatpush.msra.mxu0 0.0
          %333 = vmatpush.msra.mxu0 0.0
          %334 = vmatpush.msra.mxu0 0.0
          %335 = vmatpush.msra.mxu0 0.0
          %336 = vmatpush.msra.mxu0 0.0
          %337 = vmatpush.msra.mxu0 0.0
          %338 = vmatpush.msra.mxu0 %v321
          %339 = vmatmul.f32.gmra.mxu0 %v318
          %v340 = vpop.f32.mrf.mxu0
          %v341 = vadd.f32 %v315, %v340
          %342 = vdwg.mxu0
          %343 = vst [vmem:[#allocation8] sm:$0xff] %v341
        $region48: #{tpu_custom_call.1} parent=31 // pred_fallthru
          _
        // Predicated region
        $region49: #{tpu_custom_call.1} parent=31 // pred_check
          %p344 = pneg %p128
        $region50: #{tpu_custom_call.1} parent=31 // pred_check_branch
          %346 = sbr.rel (%p344) target = $region52
        $region51: #{tpu_custom_call.1} parent=31 // pred_region
          %348 = vsyncadd [#allocation5], 0
          %s349 = smul.addr %s24, 8
          %s350 = scalar_lea.hbm %s3, %s349
          %s352 = sshll.u32 [#allocation8], 4
          %s353 = int_to_ptr.vmem [resolvable:$true] %s352
          %s354 = sshll.u32 %s350, 4
          %s355 = int_to_ptr.hbm [resolvable:$true] %s354
          %357 = dma.vmem_to_hbm [thread:$0]  %s353, 128, %s355, [#allocation5]
        $region52: #{tpu_custom_call.1} parent=31 // pred_fallthru
          _
        // Predicated region
        $region53: #{tpu_custom_call.1} parent=31 // pred_check
          %p358 = pneg %p128
        $region54: #{tpu_custom_call.1} parent=31 // pred_check_branch
          %360 = sbr.rel (%p358) target = $region56
        $region55: #{tpu_custom_call.1} parent=31 // pred_region
          %362 = dma.done [#allocation5], 128
        $region56: #{tpu_custom_call.1} parent=31 // pred_fallthru
          _
      $region32: #{tpu_custom_call.1} parent=5 // pred_fallthru
        _
      %p363 = scmp.le.s32.totalorder 2, %s14
      // Predicated region
      $region57: #{tpu_custom_call.1} parent=5 // pred_check
        %p364 = pneg %p363
      $region58: #{tpu_custom_call.1} parent=5 // pred_check_branch
        %366 = sbr.rel (%p364) target = $region60
      $region59: #{tpu_custom_call.1} parent=5 // pred_region
        %s367 = ssub.s32 %s14, 2
      $region60: #{tpu_custom_call.1} parent=5 // pred_fallthru
        _
    $region6: #{tpu_custom_call.1} parent=1 // loop_footer
      %s18 = sadd.s32 1, %s14
    $region7: #{tpu_custom_call.1} parent=1 // loop_footer_branch
      %13 = sbr.rel target = $region3
    $region8: #{tpu_custom_call.1} parent=1 // loop_exit
      _
    %368 = vsyncpa [#allocation4], 1
    %s369 = scalar_lea.sflag [#allocation4], 1
    %370 = vsyncpa %s369, 1
    %371 = vsyncpa [#allocation7], 1
    %372 = vsyncpa [#allocation5], 1
    %s373 = scalar_lea.sflag [#allocation5], 1
    %374 = vsyncpa %s373, 1

</llo_original>
